<compile_context>
chip_gen: v7x
topology: tpu7x:2x2x1
jax: 0.10.0
libtpu: 0.0.40
codegen_flags: <defaults>
</compile_context>

<pallas_src>
import math
from functools import partial

import jax
import jax.numpy as jnp
from jax.experimental import pallas as pl
from jax.experimental.pallas import tpu as pltpu


def _ffd_intermediate_kernel(x_ref, w_ref, b_ref, o_ref):
    # x_ref: (tm, H)   w_ref: (H, tn)   b_ref: (1, tn)   o_ref: (tm, tn)
    # Native-dtype matmul with f32 accumulation on the MXU (no input upcasts).
    h = jnp.dot(x_ref[...], w_ref[...], preferred_element_type=jnp.float32)
    h = h + b_ref[...].astype(jnp.float32)
    # Exact GELU (BERT): x * 0.5 * (1 + erf(x / sqrt(2))) -- kept in f32.
    # TODO(synk): tanh-approx GELU would run on the EUP slot instead of the
    # VALU, but the module spec explicitly uses the exact erf form.
    inv_sqrt2 = jnp.float32(1.0 / math.sqrt(2.0))
    g = h * jnp.float32(0.5) * (jnp.float32(1.0) + jax.lax.erf(h * inv_sqrt2))
    o_ref[...] = g.astype(o_ref.dtype)


def _pick_tile(dim, preferred, align):
    """Full dim if it fits in one tile, else `preferred` rounded down to `align`."""
    if dim <= preferred:
        return dim
    return max(align, (preferred // align) * align)


@partial(jax.jit, static_argnames=("tm", "tn"))
def ffd_intermediate(hidden_states, weight_t, bias, *, tm=256, tn=512):
    """hidden_states: [B, S, H]; weight_t: [H, N] (pre-transposed); bias: [N]."""
    B, S, H = hidden_states.shape
    Hw, N = weight_t.shape
    assert Hw == H
    M = B * S

    x = hidden_states.reshape(M, H)
    b2d = bias.reshape(1, N)

    # Tile sizes: second-to-last block dims must be a multiple of 8 (16 keeps
    # bf16 sublane packing clean), last dims a multiple of 128, unless they
    # span the full array dim.  Ragged last blocks are handled by Pallas via
    # masked output stores, so no wrapper-side padding is needed.
    tm_eff = _pick_tile(M, tm, 16)
    tn_eff = _pick_tile(N, tn, 128)

    grid = (pl.cdiv(N, tn_eff), pl.cdiv(M, tm_eff))  # (outer = N, inner = M)

    out = pl.pallas_call(
        _ffd_intermediate_kernel,
        out_shape=jax.ShapeDtypeStruct((M, N), hidden_states.dtype),
        grid_spec=pltpu.PrefetchScalarGridSpec(
            num_scalar_prefetch=0,
            grid=grid,
            in_specs=[
                # Activations: change along the inner M axis.
                pl.BlockSpec((tm_eff, H), lambda j, i: (i, 0)),
                # Weight slab: constant over the inner M axis -> re-fetched
                # only when the outer N index changes.
                pl.BlockSpec((H, tn_eff), lambda j, i: (0, j)),
                # Bias slice for this N tile.
                pl.BlockSpec((1, tn_eff), lambda j, i: (0, j)),
            ],
            out_specs=pl.BlockSpec((tm_eff, tn_eff), lambda j, i: (i, j)),
        ),
        compiler_params=pltpu.CompilerParams(
            dimension_semantics=("parallel", "parallel"),
        ),
    )(x, weight_t, b2d)

    return out.reshape(B, S, N)


def _reference(hidden_states, weight, bias):
    h = jnp.einsum("bsh,nh->bsn", hidden_states, weight) + bias
    return h * 0.5 * (1.0 + jax.lax.erf(h / jnp.sqrt(2.0)))


if __name__ == "__main__":
    key = jax.random.PRNGKey(0)
    B, S, H, N = 2, 8, 32, 64  # batch, seq, hidden_size, intermediate_size

    k_x, k_w, k_b = jax.random.split(key, 3)
    hidden_states = jax.random.normal(k_x, (B, S, H), dtype=jnp.float32)
    # Deterministic parameter init (mimics nn.Linear's uniform(-1/sqrt(H), 1/sqrt(H)))
    bound = 1.0 / math.sqrt(H)
    weight = jax.random.uniform(k_w, (N, H), minval=-bound, maxval=bound,
                                dtype=jnp.float32)       # PyTorch layout [N, H]
    bias = jax.random.uniform(k_b, (N,), minval=-bound, maxval=bound,
                              dtype=jnp.float32)

    # One-time (parameter-load-time) transpose to the kernel's [H, N] layout;
    # this is NOT on the per-forward-call path.
    weight_t = jnp.asarray(weight.T)

    out = ffd_intermediate(hidden_states, weight_t, bias)
    out = jax.block_until_ready(out)

    ref = _reference(hidden_states, weight, bias)
    assert out.shape == (B, S, N)
    assert jnp.allclose(out, ref, atol=1e-4, rtol=1e-4), "mismatch vs reference"

    print("KERNEL_OK")
</pallas_src>

<mosaic_0001>
module attributes {stable_mosaic.version = 11 : i64} {
  func.func @_ffd_intermediate_kernel(%arg0: i32, %arg1: i32, %arg2: memref<16x32xf32, #tpu.memory_space<vmem>>, %arg3: memref<32x64xf32, #tpu.memory_space<vmem>>, %arg4: memref<1x64xf32, #tpu.memory_space<vmem>>, %arg5: memref<16x64xf32, #tpu.memory_space<vmem>>) attributes {dimension_semantics = [#tpu.dimension_semantics<parallel>, #tpu.dimension_semantics<parallel>], iteration_bounds = array<i64: 1, 1>, scalar_prefetch = 0 : i64, scratch_operands = 0 : i64, tpu.core_type = #tpu.core_type<tc>, window_params = [{transform_indices = @transform_0, window_bounds = array<i64: 16, 32>}, {transform_indices = @transform_1, window_bounds = array<i64: 32, 64>}, {transform_indices = @transform_2, window_bounds = array<i64: 1, 64>}, {transform_indices = @transform_3, window_bounds = array<i64: 16, 64>}]} {
    %c0 = arith.constant 0 : index
    %c0_0 = arith.constant 0 : index
    %0 = vector.load %arg2[%c0, %c0_0] : memref<16x32xf32, #tpu.memory_space<vmem>>, vector<16x32xf32>
    %c0_1 = arith.constant 0 : index
    %c0_2 = arith.constant 0 : index
    %1 = vector.load %arg3[%c0_1, %c0_2] : memref<32x64xf32, #tpu.memory_space<vmem>>, vector<32x64xf32>
    %cst = arith.constant dense<0.000000e+00> : vector<16x64xf32>
    %2 = tpu.matmul %0, %1, %cst {dimension_numbers = #tpu.dot_dimension_numbers<[1], [0], [0], [1], [0, 0, 1, 1], [], []>} : vector<16x32xf32>, vector<32x64xf32>, vector<16x64xf32> -> vector<16x64xf32>
    %c0_3 = arith.constant 0 : index
    %c0_4 = arith.constant 0 : index
    %3 = vector.load %arg4[%c0_3, %c0_4] : memref<1x64xf32, #tpu.memory_space<vmem>>, vector<1x64xf32>
    %4 = vector.broadcast %3 : vector<1x64xf32> to vector<16x64xf32>
    %5 = arith.addf %2, %4 : vector<16x64xf32>
    %cst_5 = arith.constant 5.000000e-01 : f32
    %6 = vector.broadcast %cst_5 : f32 to vector<16x64xf32>
    %7 = arith.mulf %5, %6 : vector<16x64xf32>
    %cst_6 = arith.constant 0.707106769 : f32
    %8 = vector.broadcast %cst_6 : f32 to vector<16x64xf32>
    %9 = arith.mulf %5, %8 : vector<16x64xf32>
    %10 = math.erf %9 : vector<16x64xf32>
    %cst_7 = arith.constant 1.000000e+00 : f32
    %11 = vector.broadcast %cst_7 : f32 to vector<16x64xf32>
    %12 = arith.addf %11, %10 : vector<16x64xf32>
    %13 = arith.mulf %7, %12 : vector<16x64xf32>
    %c0_8 = arith.constant 0 : index
    %c0_9 = arith.constant 0 : index
    %14 = vector.load %arg5[%c0_8, %c0_9] : memref<16x64xf32, #tpu.memory_space<vmem>>, vector<16x64xf32>
    tpu.vector_store %arg5[%c0_8, %c0_9], %13 {strides = array<i32>} : memref<16x64xf32, #tpu.memory_space<vmem>>, vector<16x64xf32>,
    return
  }
  func.func @transform_0(%arg0: i32, %arg1: i32) -> (i32, i32) {
    %c0_i32 = arith.constant 0 : i32
    %c0_i32_0 = arith.constant 0 : i32
    return %arg1, %c0_i32 : i32, i32
  }
  func.func @transform_1(%arg0: i32, %arg1: i32) -> (i32, i32) {
    %c0_i32 = arith.constant 0 : i32
    %c0_i32_0 = arith.constant 0 : i32
    return %c0_i32, %arg0 : i32, i32
  }
  func.func @transform_2(%arg0: i32, %arg1: i32) -> (i32, i32) {
    %c0_i32 = arith.constant 0 : i32
    %c0_i32_0 = arith.constant 0 : i32
    return %c0_i32, %arg0 : i32, i32
  }
  func.func @transform_3(%arg0: i32, %arg1: i32) -> (i32, i32) {
    %c0_i32 = arith.constant 0 : i32
    return %arg1, %arg0 : i32, i32
  }
}

</mosaic_0001>

<llo_original>
// kernel: ffd_intermediate.1
$region0: #{ffd_intermediate.1}
  #allocation0 [shape = 'u32[]', space=smem, size = 0x4, offset = 0x4, fixed_abs, tag = 'smem constant byte address 0x4 - core index']
  #allocation1 [shape = 'u32[144,128]{1,0:T(1,128)}', space=vmem, size = 0x12000, scoped, tag = 'internal scratch']
  %s0 = inlined_call_operand.hbm [shape: f32[16,32], index: 0, kind: input, shape index: {}]
  %s1 = inlined_call_operand.hbm [shape: f32[32,64], index: 1, kind: input, shape index: {}]
  %s2 = inlined_call_operand.vmem [shape: f32[1,64], index: 2, kind: input, shape index: {}]
  %s3 = inlined_call_operand.hbm [shape: f32[16,64], index: 3, kind: output, shape index: {}]
  %s4 = sld [smem:[#allocation0]]
  $region30: #{ffd_intermediate.1} parent=0
    _
  %s6 = ssub.s32 1, %s4
  %s7 = scalar_select 0, %s6, %s4
  $region1: #{ffd_intermediate.1} parent=0
    #allocation2 [shape = 'u8[8192]{0}', space=vmem, size = 0x2000, scoped, tag = 'input window, operand 0, single buffered']
    #allocation3 [shape = 's32[1]{0}', space=sflag, size = 0x4, scoped, tag = 'scoped memory for ffd_intermediate.1']
    #allocation4 [shape = 's32[1]{0}', space=sflag, size = 0x4, scoped, tag = 'scoped memory for ffd_intermediate.1']
    #allocation5 [shape = 'u8[16384]{0}', space=vmem, size = 0x4000, scoped, tag = 'input window, operand 1, single buffered']
    #allocation6 [shape = 's32[1]{0}', space=sflag, size = 0x4, scoped, tag = 'scoped memory for ffd_intermediate.1']
    #allocation7 [shape = 'u8[8192]{0}', space=vmem, size = 0x2000, scoped, tag = 'output window, operand 0, single buffered']
    %8 = vsyncpa [#allocation3], 0
    %9 = vsyncpa [#allocation6], 0
    %10 = vsyncpa [#allocation4], 0
    // Predicated region
    $region2: #{ffd_intermediate.1} parent=1 // pred_check
      _
    $region3: #{ffd_intermediate.1} parent=1 // pred_check_branch
      %12 = sbr.rel (0) target = $region5
    $region4: #{ffd_intermediate.1} parent=1 // pred_region
      %s14 = ssub.s32 256, 256
      %15 = vsyncadd [#allocation3], %s14
      %s16 = sshll.u32 [#allocation2], 4
      %s17 = int_to_ptr.vmem [resolvable:$true] %s16
      %22 = dma.hbm_to_vmem [thread:$0]  %s0, 256, %s17, [#allocation3], 128, 128, 8
    $region5: #{ffd_intermediate.1} parent=1 // pred_fallthru
      _
    // Predicated region
    $region6: #{ffd_intermediate.1} parent=1 // pred_check
      _
    $region7: #{ffd_intermediate.1} parent=1 // pred_check_branch
      %24 = sbr.rel (0) target = $region9
    $region8: #{ffd_intermediate.1} parent=1 // pred_region
      %s26 = ssub.s32 512, 512
      %27 = vsyncadd [#allocation6], %s26
      %s28 = sshll.u32 [#allocation5], 4
      %s29 = int_to_ptr.vmem [resolvable:$true] %s28
      %34 = dma.hbm_to_vmem [thread:$0]  %s1, 512, %s29, [#allocation6], 128, 128, 8
    $region9: #{ffd_intermediate.1} parent=1 // pred_fallthru
      _
    // Predicated region
    $region10: #{ffd_intermediate.1} parent=1 // pred_check
      _
    $region11: #{ffd_intermediate.1} parent=1 // pred_check_branch
      %36 = sbr.rel (0) target = $region13
    $region12: #{ffd_intermediate.1} parent=1 // pred_region
      _
    $region13: #{ffd_intermediate.1} parent=1 // pred_fallthru
      _
    // Predicated region
    $region14: #{ffd_intermediate.1} parent=1 // pred_check
      _
    $region15: #{ffd_intermediate.1} parent=1 // pred_check_branch
      %38 = sbr.rel (0) target = $region17
    $region16: #{ffd_intermediate.1} parent=1 // pred_region
      %39 = dma.done [#allocation3], 256
    $region17: #{ffd_intermediate.1} parent=1 // pred_fallthru
      _
    // Predicated region
    $region18: #{ffd_intermediate.1} parent=1 // pred_check
      _
    $region19: #{ffd_intermediate.1} parent=1 // pred_check_branch
      %41 = sbr.rel (0) target = $region21
    $region20: #{ffd_intermediate.1} parent=1 // pred_region
      %42 = dma.done [#allocation6], 512
    $region21: #{ffd_intermediate.1} parent=1 // pred_fallthru
      _
    %v43 = vld [vmem:[#allocation2] sm:$0xff]
    %v44 = vld [vmem:[#allocation2 + $0x8] sm:$0xff]
    %v45 = vld [vmem:[#allocation5] sm:$0xff]
    %v46 = vld [vmem:[#allocation5 + $0x8] sm:$0xff]
    %v47 = vld [vmem:[#allocation5 + $0x10] sm:$0xff]
    %v48 = vld [vmem:[#allocation5 + $0x18] sm:$0xff]
    %v49 = vld [vmem:[%s2] sm:$0x1]
    %v51 = vlaneseq
    %v52 = vshrl.u32 %v51, 7
    %v53 = vsub.s32 0, %v52
    %v54 = vrot.slane %v49, %v53
    %vm56 = vcmask 261120
    %v58 = vsel %vm56, %v43, 0
    %v61 = vsel %vm56, %v44, 0
    %63 = vmatprep.subr.mxu0 0.0
    %64 = vmatpush1.msra.mxu0 %v45
    %65 = vmatprep.subr.mxu0 0.0
    %66 = vmatpush1.msra.mxu0 %v46
    %67 = vmatprep.subr.mxu0 0.0
    %68 = vmatpush1.msra.mxu0 %v47
    %69 = vmatprep.subr.mxu0 0.0
    %70 = vmatpush1.msra.mxu0 %v48
    %71 = vmatprep.subr.mxu0 0.0
    %72 = vmatpush1.msra.mxu0 0.0
    %73 = vmatprep.subr.mxu0 0.0
    %74 = vmatpush1.msra.mxu0 0.0
    %75 = vmatprep.subr.mxu0 0.0
    %76 = vmatpush1.msra.mxu0 0.0
    %77 = vmatprep.subr.mxu0 0.0
    %78 = vmatpush1.msra.mxu0 0.0
    %79 = vmatprep.subr.mxu0 0.0
    %80 = vmatpush1.msra.mxu0 0.0
    %81 = vmatprep.subr.mxu0 0.0
    %82 = vmatpush1.msra.mxu0 0.0
    %83 = vmatprep.subr.mxu0 0.0
    %84 = vmatpush1.msra.mxu0 0.0
    %85 = vmatprep.subr.mxu0 0.0
    %86 = vmatpush1.msra.mxu0 0.0
    %87 = vmatprep.subr.mxu0 0.0
    %88 = vmatpush1.msra.mxu0 0.0
    %89 = vmatprep.subr.mxu0 0.0
    %90 = vmatpush1.msra.mxu0 0.0
    %91 = vmatprep.subr.mxu0 0.0
    %92 = vmatpush1.msra.mxu0 0.0
    %93 = vmatprep.subr.mxu0 0.0
    %94 = vmatpush1.msra.mxu0 0.0
    %95 = vmatprep.subr.mxu0 0.0
    %96 = vmatpush1.msra.mxu0 0.0
    %97 = vmatprep.subr.mxu0 0.0
    %98 = vmatpush1.msra.mxu0 0.0
    %99 = vmatprep.subr.mxu0 0.0
    %100 = vmatpush1.msra.mxu0 0.0
    %101 = vmatprep.subr.mxu0 0.0
    %102 = vmatpush1.msra.mxu0 0.0
    %103 = vmatprep.subr.mxu0 0.0
    %104 = vmatpush1.msra.mxu0 0.0
    %105 = vmatprep.subr.mxu0 0.0
    %106 = vmatpush1.msra.mxu0 0.0
    %107 = vmatprep.subr.mxu0 0.0
    %108 = vmatpush1.msra.mxu0 0.0
    %109 = vmatprep.subr.mxu0 0.0
    %110 = vmatpush1.msra.mxu0 0.0
    %111 = vmatprep.subr.mxu0 0.0
    %112 = vmatpush1.msra.mxu0 0.0
    %113 = vmatprep.subr.mxu0 0.0
    %114 = vmatpush1.msra.mxu0 0.0
    %115 = vmatprep.subr.mxu0 0.0
    %116 = vmatpush1.msra.mxu0 0.0
    %117 = vmatprep.subr.mxu0 0.0
    %118 = vmatpush1.msra.mxu0 0.0
    %119 = vmatprep.subr.mxu0 0.0
    %120 = vmatpush1.msra.mxu0 0.0
    %121 = vmatprep.subr.mxu0 0.0
    %122 = vmatpush1.msra.mxu0 0.0
    %123 = vmatprep.subr.mxu0 0.0
    %124 = vmatpush1.msra.mxu0 0.0
    %125 = vmatprep.subr.mxu0 0.0
    %126 = vmatpush1.msra.mxu0 0.0
    %127 = vmatprep.mubr.f32.mxu0 0.0
    %128 = vmatmul.mubr.f32.gmra.mrb[0].mxu0 %v58
    %v129 = vpop.f32.mrb[0].mxu0
    %v130 = vadd.f32 %v54, %v129
    %v131 = vpop.f32.mrb[0].mxu0
    %132 = vmatprep.mubr.f32.mxu0 0.0
    %133 = vmatmul.mubr.f32.gmra.mrb[0].mxu0 %v61
    %v134 = vpop.f32.mrb[0].mxu0
    %v135 = vadd.f32 %v54, %v134
    %v136 = vpop.f32.mrb[0].mxu0
    %137 = vdwg.mxu0
    %v138 = vmul.f32 %v130, 0.5
    %v139 = vmul.f32 %v135, 0.5
    %v140 = vmul.f32 %v130, 0.70710677
    %v141 = vmul.f32 %v135, 0.70710677
    %v142 = verf.f32.pop %v140
    %v143 = verf.f32.pop %v141
    %v144 = vadd.f32 %v142, 1.0
    %v145 = vadd.f32 %v143, 1.0
    %v146 = vmul.f32 %v138, %v144
    %v147 = vmul.f32 %v139, %v145
    %vm148 = vcmask 523264
    %149 = vst.msk [vmem:[#allocation7] sm:$0xff] %vm148, %v146
    %150 = vst.msk [vmem:[#allocation7 + $0x8] sm:$0xff] %vm148, %v147
    // Predicated region
    $region22: #{ffd_intermediate.1} parent=1 // pred_check
      _
    $region23: #{ffd_intermediate.1} parent=1 // pred_check_branch
      %152 = sbr.rel (0) target = $region25
    $region24: #{ffd_intermediate.1} parent=1 // pred_region
      %s154 = ssub.s32 256, 256
      %155 = vsyncadd [#allocation4], %s154
      %s156 = sshll.u32 [#allocation7], 4
      %s157 = int_to_ptr.vmem [resolvable:$true] %s156
      %162 = dma.vmem_to_hbm [thread:$0]  %s157, 256, %s3, [#allocation4], 128, 128, 8
    $region25: #{ffd_intermediate.1} parent=1 // pred_fallthru
      _
    // Predicated region
    $region26: #{ffd_intermediate.1} parent=1 // pred_check
      _
    $region27: #{ffd_intermediate.1} parent=1 // pred_check_branch
      %164 = sbr.rel (0) target = $region29
    $region28: #{ffd_intermediate.1} parent=1 // pred_region
      %165 = dma.done [#allocation4], 256
    $region29: #{ffd_intermediate.1} parent=1 // pred_fallthru
      _
    %166 = vsyncpa [#allocation3], 1
    %167 = vsyncpa [#allocation6], 1
    %168 = vsyncpa [#allocation4], 1

</llo_original>
